<compile_context>
chip_gen: v6e
topology: v6e:2x2x1
jax: 0.10.0
libtpu: 0.0.40
codegen_flags: <defaults>
</compile_context>

<pallas_src>
import numpy as np
import jax
import jax.numpy as jnp
from jax.experimental import pallas as pl
from jax.experimental.pallas import tpu as pltpu

_LANE = 128
_SUBLANE = 8
_SMALL_PLANE_BYTES = 1 * 1024 * 1024   # per-batch (S, D) plane below this -> batch-tiled path
_MAX_ROW_TILE = 8192                    # generous cap; the real limit is the VMEM byte budget


def make_pe_table(d_model: int, max_len: int = 5000) -> jnp.ndarray:
    """Sinusoidal table identical to the PyTorch __init__ buffer. Shape (max_len, d_model), f32."""
    position = np.arange(max_len, dtype=np.float32)[:, None]                 # (max_len, 1)
    div_term = np.exp(np.arange(0, d_model, 2, dtype=np.float32)
                      * (-np.log(10000.0) / d_model))                         # (ceil(d/2),)
    pe = np.zeros((max_len, d_model), dtype=np.float32)
    pe[:, 0::2] = np.sin(position * div_term)
    pe[:, 1::2] = np.cos(position * div_term[: d_model // 2])                 # explicit slice (odd-d safe)
    return jnp.asarray(pe, dtype=jnp.float32)


def _pe_add_kernel(x_ref, pe_ref, o_ref):
    # Row path:   x/o (t_rows, cols),    pe (t_rows, cols)  -> plain elementwise add
    # Batch path: x/o (t_b, rows, cols), pe (rows, cols)    -> leading-axis broadcast on the VPU
    o_ref[...] = x_ref[...] + pe_ref[...]


def _budgets():
    """(tile byte budget, scoped VMEM limit) gated on the chip generation."""
    vmem_cap = None
    try:
        info = pltpu.get_tpu_info()
        for attr in ("vmem_capacity_bytes", "vmem_size_bytes", "vmem_bytes"):
            val = getattr(info, attr, None)
            if val:
                vmem_cap = int(val)
                break
    except Exception:
        vmem_cap = None
    if vmem_cap is not None and vmem_cap >= 96 * 1024 * 1024:
        # v5e / v6e: 128 MiB physical VMEM -> roomier tiles + higher scoped limit.
        return 40 * 1024 * 1024, 64 * 1024 * 1024
    # v7x (64 MiB per TensorCore) or unknown generation: stay conservative.
    return 20 * 1024 * 1024, 32 * 1024 * 1024


def positional_encoding(x: jnp.ndarray, pe_table: jnp.ndarray) -> jnp.ndarray:
    """x: (B, S, D); pe_table: (max_len, D). Returns x + pe_table[:S] broadcast over batch, in x.dtype."""
    B, S, D = x.shape
    max_len, d_model = pe_table.shape
    assert S <= max_len, f"sequence length {S} exceeds positional table max_len {max_len}"
    assert d_model == D, f"d_model mismatch: x has {D}, pe_table has {d_model}"

    x_dtype = x.dtype
    itemsize = jnp.dtype(x_dtype).itemsize
    tile_budget, vmem_limit = _budgets()

    # ---- lane-dense layout of the (S, D) plane ------------------------------------------
    pad_cols = 0
    if D % _LANE == 0:
        layout = "direct"
        rows, cols = S, D
        x_r = x
    elif (S * D) % _LANE == 0:
        layout = "flat"                      # view the plane as (S*D/128, 128): full-vreg stores
        rows, cols = (S * D) // _LANE, _LANE
        x_r = x.reshape(B, rows, cols)
    else:
        layout = "pad"                       # pad feature dim to a lane multiple: full vst stores
        pad_cols = (-D) % _LANE
        rows, cols = S, D + pad_cols
        x_r = jnp.pad(x, ((0, 0), (0, 0), (0, pad_cols)))

    def pe_plane():
        # Materialize the (rows, cols) positional plane in x.dtype (outside the hot kernel loop).
        pe = pe_table[:S, :]
        if pe.dtype != x_dtype:
            pe = pe.astype(x_dtype)
        if layout == "flat":
            pe = pe.reshape(rows, cols)
        elif layout == "pad":
            pe = jnp.pad(pe, ((0, 0), (0, pad_cols)))
        return pe

    plane_bytes = rows * cols * itemsize
    flops = B * rows * cols
    bytes_accessed = (2 * B + 1) * rows * cols * itemsize
    cost = pl.CostEstimate(flops=flops, transcendentals=0, bytes_accessed=bytes_accessed)

    if plane_bytes <= _SMALL_PLANE_BYTES:
        # ---------- batch-tiled path: pack many batch elements per grid step --------------
        per_batch = 4 * plane_bytes                     # double-buffered x-in + out tiles
        t_b = max(1, tile_budget // max(per_batch, 1))
        t_b = min(t_b, B)
        if B > 1 and pl.cdiv(B, t_b) < 2:
            t_b = pl.cdiv(B, 2)                         # >= 2 grid steps so both v7x cores get work
        n_b = pl.cdiv(B, t_b)
        out = pl.pallas_call(
            _pe_add_kernel,
            out_shape=jax.ShapeDtypeStruct((B, rows, cols), x_dtype),
            grid_spec=pltpu.PrefetchScalarGridSpec(
                num_scalar_prefetch=0,
                grid=(n_b,),
                in_specs=[
                    pl.BlockSpec((t_b, rows, cols), lambda b: (b, 0, 0)),   # x tile (many batches)
                    pl.BlockSpec((rows, cols), lambda b: (0, 0)),           # pe tile (constant -> reused)
                ],
                out_specs=pl.BlockSpec((t_b, rows, cols), lambda b: (b, 0, 0)),
            ),
            compiler_params=pltpu.CompilerParams(
                dimension_semantics=("parallel",),
                vmem_limit_bytes=vmem_limit,
            ),
            cost_estimate=cost,
        )(x_r, pe_plane())
    else:
        # ---------- row-tiled path: tile the sequence axis, batch squeezed ----------------
        bytes_per_row = cols * itemsize * 6             # x-in, out, pe -- each double-buffered
        if rows <= _SUBLANE:
            t_rows = rows                               # block dim == full array dim is always legal
        else:
            t_rows = max(1, tile_budget // bytes_per_row)
            t_rows = min(t_rows, rows, _MAX_ROW_TILE)
            t_rows = max(_SUBLANE, (t_rows // _SUBLANE) * _SUBLANE)
            t_rows = min(t_rows, rows)
            # v7x: guarantee >= 2 grid steps so both TensorCores are fed (free elsewhere).
            if B == 1 and t_rows >= rows and rows >= 2 * _SUBLANE:
                half = pl.cdiv(rows, 2)
                t_rows = min(rows, ((half + _SUBLANE - 1) // _SUBLANE) * _SUBLANE)
            # Avoid a ragged (masked-store) last tile when a nearby 8-aligned divisor exists.
            if 0 < t_rows < rows and rows % t_rows != 0:
                for cand in range(t_rows, max(_SUBLANE - 1, t_rows // 2), -_SUBLANE):
                    if rows % cand == 0:
                        t_rows = cand
                        break
        n_rt = pl.cdiv(rows, t_rows)

        # pe operand: index straight into the full table (no slice/copy) when that is legal.
        if layout == "direct" and pe_table.dtype == x_dtype and (t_rows % _SUBLANE == 0 or t_rows == max_len):
            pe_in = pe_table
        else:
            pe_in = pe_plane()

        out = pl.pallas_call(
            _pe_add_kernel,
            out_shape=jax.ShapeDtypeStruct((B, rows, cols), x_dtype),
            grid_spec=pltpu.PrefetchScalarGridSpec(
                num_scalar_prefetch=0,
                grid=(n_rt, B),                          # batch innermost -> pe tile reused across batch
                in_specs=[
                    pl.BlockSpec((pl.Squeezed(), t_rows, cols), lambda r, b: (b, r, 0)),  # x tile
                    pl.BlockSpec((t_rows, cols), lambda r, b: (r, 0)),                    # pe tile
                ],
                out_specs=pl.BlockSpec((pl.Squeezed(), t_rows, cols), lambda r, b: (b, r, 0)),
            ),
            compiler_params=pltpu.CompilerParams(
                dimension_semantics=("parallel", "parallel"),
                vmem_limit_bytes=vmem_limit,
            ),
            cost_estimate=cost,
        )(x_r, pe_in)

    if layout == "pad":
        out = out[:, :, :D]
    else:
        out = out.reshape(B, S, D)
    return out


if __name__ == "__main__":
    key = jax.random.PRNGKey(0)
    k0, k1 = jax.random.split(key)

    # 1) Small-plane / batch-tiled path (flattened lane-dense layout): B=2, S=8, D=32.
    B, S, D = 2, 8, 32
    pe_table = make_pe_table(D, max_len=64)
    x = jax.random.normal(k0, (B, S, D), dtype=jnp.float32)
    out = jax.block_until_ready(positional_encoding(x, pe_table))
    ref = x + pe_table[None, :S, :].astype(x.dtype)
    np.testing.assert_allclose(np.asarray(out), np.asarray(ref), rtol=1e-6, atol=1e-6)

    # 2) Row-tiled path with direct pe-table indexing (D % 128 == 0, plane > 1 MiB).
    B2, S2, D2 = 1, 2048, 256
    pe_table2 = make_pe_table(D2, max_len=2048)
    x2 = jax.random.normal(k1, (B2, S2, D2), dtype=jnp.float32)
    out2 = jax.block_until_ready(positional_encoding(x2, pe_table2))
    ref2 = x2 + pe_table2[None, :S2, :].astype(x2.dtype)
    np.testing.assert_allclose(np.asarray(out2), np.asarray(ref2), rtol=1e-6, atol=1e-6)

    print("KERNEL_OK")
</pallas_src>

<mosaic_0001>
module attributes {stable_mosaic.version = 11 : i64} {
  func.func @_pe_add_kernel(%arg0: i32, %arg1: memref<1x2x128xf32, #tpu.memory_space<vmem>>, %arg2: memref<2x128xf32, #tpu.memory_space<vmem>>, %arg3: memref<1x2x128xf32, #tpu.memory_space<vmem>>) attributes {dimension_semantics = [#tpu.dimension_semantics<parallel>], iteration_bounds = array<i64: 2>, scalar_prefetch = 0 : i64, scratch_operands = 0 : i64, tpu.core_type = #tpu.core_type<tc>, window_params = [{transform_indices = @transform_0, window_bounds = array<i64: 1, 2, 128>}, {pipeline_mode = #tpu.pipeline_mode<synchronous>, transform_indices = @transform_1, window_bounds = array<i64: 2, 128>}, {transform_indices = @transform_2, window_bounds = array<i64: 1, 2, 128>}]} {
    %c0 = arith.constant 0 : index
    %c0_0 = arith.constant 0 : index
    %c0_1 = arith.constant 0 : index
    %0 = vector.load %arg1[%c0, %c0_0, %c0_1] : memref<1x2x128xf32, #tpu.memory_space<vmem>>, vector<1x2x128xf32>
    %c0_2 = arith.constant 0 : index
    %c0_3 = arith.constant 0 : index
    %1 = vector.load %arg2[%c0_2, %c0_3] : memref<2x128xf32, #tpu.memory_space<vmem>>, vector<2x128xf32>
    %2 = vector.shape_cast %1 : vector<2x128xf32> to vector<1x2x128xf32>
    %3 = arith.addf %0, %2 : vector<1x2x128xf32>
    %c0_4 = arith.constant 0 : index
    %c0_5 = arith.constant 0 : index
    %c0_6 = arith.constant 0 : index
    %4 = vector.load %arg3[%c0_4, %c0_5, %c0_6] : memref<1x2x128xf32, #tpu.memory_space<vmem>>, vector<1x2x128xf32>
    tpu.vector_store %arg3[%c0_4, %c0_5, %c0_6], %3 {strides = array<i32>} : memref<1x2x128xf32, #tpu.memory_space<vmem>>, vector<1x2x128xf32>,
    return
  }
  func.func @transform_0(%arg0: i32) -> (i32, i32, i32) {
    %c0_i32 = arith.constant 0 : i32
    %c0_i32_0 = arith.constant 0 : i32
    %c0_i32_1 = arith.constant 0 : i32
    return %arg0, %c0_i32, %c0_i32_0 : i32, i32, i32
  }
  func.func @transform_1(%arg0: i32) -> (i32, i32) {
    %c0_i32 = arith.constant 0 : i32
    %c0_i32_0 = arith.constant 0 : i32
    %c0_i32_1 = arith.constant 0 : i32
    return %c0_i32, %c0_i32_0 : i32, i32
  }
  func.func @transform_2(%arg0: i32) -> (i32, i32, i32) {
    %c0_i32 = arith.constant 0 : i32
    %c0_i32_0 = arith.constant 0 : i32
    %c0_i32_1 = arith.constant 0 : i32
    return %arg0, %c0_i32, %c0_i32_0 : i32, i32, i32
  }
}

</mosaic_0001>

<llo_original>
// kernel: tpu_custom_call.1
$region0: #{tpu_custom_call.1}
  #allocation0 [shape = 'u32[]', space=smem, size = 0x4, offset = 0x4, fixed_abs, tag = 'smem constant byte address 0x4 - core index']
  #allocation1 [shape = 'u32[144,128]{1,0:T(1,128)}', space=vmem, size = 0x12000, scoped, tag = 'internal scratch']
  %s0 = inlined_call_operand.hbm [shape: f32[2,2,128], index: 0, kind: input, shape index: {}]
  %s1 = inlined_call_operand.hbm [shape: f32[2,128], index: 1, kind: input, shape index: {}]
  %s2 = inlined_call_operand.hbm [shape: f32[2,2,128], index: 2, kind: output, shape index: {}]
  %s3 = sld [smem:[#allocation0]]
  $region49: #{tpu_custom_call.1} parent=0
    _
  %s5 = ssub.s32 1, %s3
  %s6 = scalar_select 0, %s5, %s3
  $region1: #{tpu_custom_call.1} parent=0
    #allocation2 [shape = 'u8[2048]{0}', space=vmem, size = 0x800, scoped, tag = 'input window, operand 0']
    #allocation3 [shape = 's32[2]{0}', space=sflag, size = 0x8, scoped, tag = 'scoped memory for tpu_custom_call.1']
    #allocation4 [shape = 's32[2]{0}', space=sflag, size = 0x8, scoped, tag = 'scoped memory for tpu_custom_call.1']
    #allocation5 [shape = 'u8[1024]{0}', space=vmem, size = 0x400, scoped, tag = 'input window, operand 1, single buffered']
    #allocation6 [shape = 's32[1]{0}', space=sflag, size = 0x4, scoped, tag = 'scoped memory for tpu_custom_call.1']
    #allocation7 [shape = 'u8[2048]{0}', space=vmem, size = 0x800, scoped, tag = 'output window, operand 0']
    %7 = vsyncpa [#allocation3], 0
    %s8 = scalar_lea.sflag [#allocation3], 1
    %9 = vsyncpa %s8, 0
    %10 = vsyncpa [#allocation6], 0
    %11 = vsyncpa [#allocation4], 0
    %s12 = scalar_lea.sflag [#allocation4], 1
    %13 = vsyncpa %s12, 0
    loop: start=0, step=1, limit=4
    $region2: #{tpu_custom_call.1} parent=1 // loop_pre_header
      _
    $region3: #{tpu_custom_call.1} parent=1 // loop_header
      %s15 = sphi 0, %s19
      %p16 = scmp.ge.s32.totalorder %s15, 4
      %s25 = sphi 0, %s27
      %s28 = sphi 0, %s25
      %s29 = sphi 0, %s28
      %s45 = sphi 0, %s29
      %s49 = sphi 0, %s49
      %s51 = sphi 0, %s49
      %s52 = sphi 0, %s51
      %s66 = sphi 0, %s52
      %s72 = sphi 0, %s74
      %s75 = sphi 0, %s72
      %s76 = sphi 0, %s75
      %s92 = sphi 0, %s76
    $region4: #{tpu_custom_call.1} parent=1 // loop_header_branch
      %18 = sbr.rel (%p16) target = $region8
    $region5: #{tpu_custom_call.1} parent=1 // loop_body
      %s20 = ssub.s32 %s15, 1
      %s21 = ssub.s32 %s15, 2
      %s22 = sadd.s32 %s15, 1
      %s23 = ssub.s32 %s15, %s22
      %p24 = scmp.eq.s32.totalorder %s23, 0
      %s26 = sadd.s32 %s25, 1
      %s27 = scalar_select %p24, %s25, %s26
      %p30 = pneg %p24
      %p31 = scmp.eq.s32.totalorder %s15, 1
      %p32 = por %p30, %p31
      %p33 = scmp.ne.s32.totalorder %s25, %s28
      %p34 = scmp.eq.s32.totalorder %s15, 0
      %p35 = por %p33, %p34
      %p36 = scmp.ne.s32.totalorder %s25, %s28
      %p37 = scmp.eq.s32.totalorder %s20, 1
      %p38 = por %p36, %p37
      %p39 = scmp.ne.s32.totalorder %s28, %s29
      %p40 = scmp.eq.s32.totalorder %s20, 0
      %p41 = por %p39, %p40
      %p42 = scmp.ne.s32.totalorder %s28, %s29
      %p43 = scmp.eq.s32.totalorder %s21, 1
      %p44 = por %p42, %p43
      %p46 = scmp.ne.s32.totalorder %s29, %s45
      %p47 = scmp.eq.s32.totalorder %s21, 0
      %p48 = por %p46, %p47
      %s50 = sadd.s32 %s49, 1
      %p53 = scmp.eq.s32.totalorder %s15, 1
      %p54 = scmp.ne.s32.totalorder %s49, %s51
      %p55 = scmp.eq.s32.totalorder %s15, 0
      %p56 = por %p54, %p55
      %p57 = scmp.ne.s32.totalorder %s49, %s51
      %p58 = scmp.eq.s32.totalorder %s20, 1
      %p59 = por %p57, %p58
      %p60 = scmp.ne.s32.totalorder %s51, %s52
      %p61 = scmp.eq.s32.totalorder %s20, 0
      %p62 = por %p60, %p61
      %p63 = scmp.ne.s32.totalorder %s51, %s52
      %p64 = scmp.eq.s32.totalorder %s21, 1
      %p65 = por %p63, %p64
      %p67 = scmp.ne.s32.totalorder %s52, %s66
      %p68 = scmp.eq.s32.totalorder %s21, 0
      %p69 = por %p67, %p68
      %s70 = ssub.s32 %s15, %s22
      %p71 = scmp.eq.s32.totalorder %s70, 0
      %s73 = sadd.s32 %s72, 1
      %s74 = scalar_select %p71, %s72, %s73
      %p77 = pneg %p71
      %p78 = scmp.eq.s32.totalorder %s15, 1
      %p79 = por %p77, %p78
      %p80 = scmp.ne.s32.totalorder %s72, %s75
      %p81 = scmp.eq.s32.totalorder %s15, 0
      %p82 = por %p80, %p81
      %p83 = scmp.ne.s32.totalorder %s72, %s75
      %p84 = scmp.eq.s32.totalorder %s20, 1
      %p85 = por %p83, %p84
      %p86 = scmp.ne.s32.totalorder %s75, %s76
      %p87 = scmp.eq.s32.totalorder %s20, 0
      %p88 = por %p86, %p87
      %p89 = scmp.ne.s32.totalorder %s75, %s76
      %p90 = scmp.eq.s32.totalorder %s21, 1
      %p91 = por %p89, %p90
      %p93 = scmp.ne.s32.totalorder %s76, %s92
      %p94 = scmp.eq.s32.totalorder %s21, 0
      %p95 = por %p93, %p94
      %p96 = scmp.le.s32.totalorder 1, %s15
      %p97 = scmp.lt.s32.totalorder %s15, 3
      %p98 = pnand %p96, %p97
      %p99 = pneg %p98
      // Predicated region
      $region9: #{tpu_custom_call.1} parent=5 // pred_check
        _
      $region10: #{tpu_custom_call.1} parent=5 // pred_check_branch
        %101 = sbr.rel (%p98) target = $region12
      $region11: #{tpu_custom_call.1} parent=5 // pred_region
        %s102 = ssub.s32 %s15, 1
        // Predicated region
        $region13: #{tpu_custom_call.1} parent=11 // pred_check
          %p103 = pneg %p62
        $region14: #{tpu_custom_call.1} parent=11 // pred_check_branch
          %105 = sbr.rel (%p103) target = $region16
        $region15: #{tpu_custom_call.1} parent=11 // pred_region
          %s107 = ssub.s32 32, 32
          %108 = vsyncadd [#allocation6], %s107
          %s110 = sshll.u32 [#allocation5], 4
          %s111 = int_to_ptr.vmem [resolvable:$true] %s110
          %113 = dma.hbm_to_vmem [thread:$0]  %s1, 32, %s111, [#allocation6]
        $region16: #{tpu_custom_call.1} parent=11 // pred_fallthru
          _
      $region12: #{tpu_custom_call.1} parent=5 // pred_fallthru
        _
      %p114 = scmp.lt.s32.totalorder %s15, 2
      // Predicated region
      $region17: #{tpu_custom_call.1} parent=5 // pred_check
        %p115 = pneg %p114
      $region18: #{tpu_custom_call.1} parent=5 // pred_check_branch
        %117 = sbr.rel (%p115) target = $region20
      $region19: #{tpu_custom_call.1} parent=5 // pred_region
        // Predicated region
        $region21: #{tpu_custom_call.1} parent=19 // pred_check
          %p118 = pneg %p35
        $region22: #{tpu_custom_call.1} parent=19 // pred_check_branch
          %120 = sbr.rel (%p118) target = $region24
        $region23: #{tpu_custom_call.1} parent=19 // pred_region
          %s121 = sand.u32 %s25, 1
          %s122 = scalar_lea.sflag [#allocation3], %s121
          %s123 = sand.u32 %s25, 1
          %s124 = smul.addr %s123, 2
          %s125 = scalar_lea.vmem [#allocation2], %s124
          %s127 = ssub.s32 32, 32
          %128 = vsyncadd %s122, %s127
          %s129 = smul.addr %s15, 32
          %s130 = scalar_lea.hbm %s0, %s129
          %s132 = sshll.u32 %s125, 4
          %s133 = int_to_ptr.vmem [resolvable:$true] %s132
          %135 = dma.hbm_to_vmem [thread:$0]  %s130, 32, %s133, %s122
        $region24: #{tpu_custom_call.1} parent=19 // pred_fallthru
          _
      $region20: #{tpu_custom_call.1} parent=5 // pred_fallthru
        _
      %p136 = scmp.le.s32.totalorder 1, %s15
      %p137 = scmp.lt.s32.totalorder %s15, 3
      %p138 = pnand %p136, %p137
      %p139 = pneg %p138
      // Predicated region
      $region25: #{tpu_custom_call.1} parent=5 // pred_check
        _
      $region26: #{tpu_custom_call.1} parent=5 // pred_check_branch
        %141 = sbr.rel (%p138) target = $region28
      $region27: #{tpu_custom_call.1} parent=5 // pred_region
        %s142 = ssub.s32 %s15, 1
        %s143 = sand.u32 %s28, 1
        %s144 = scalar_lea.sflag [#allocation3], %s143
        %s145 = sand.u32 %s28, 1
        %s146 = smul.addr %s145, 2
        %s147 = scalar_lea.vmem [#allocation2], %s146
        // Predicated region
        $region29: #{tpu_custom_call.1} parent=27 // pred_check
          %p148 = pneg %p41
        $region30: #{tpu_custom_call.1} parent=27 // pred_check_branch
          %150 = sbr.rel (%p148) target = $region32
        $region31: #{tpu_custom_call.1} parent=27 // pred_region
          %151 = dma.done %s144, 32
        $region32: #{tpu_custom_call.1} parent=27 // pred_fallthru
          _
        // Predicated region
        $region33: #{tpu_custom_call.1} parent=27 // pred_check
          %p152 = pneg %p62
        $region34: #{tpu_custom_call.1} parent=27 // pred_check_branch
          %154 = sbr.rel (%p152) target = $region36
        $region35: #{tpu_custom_call.1} parent=27 // pred_region
          %155 = dma.done [#allocation6], 32
        $region36: #{tpu_custom_call.1} parent=27 // pred_fallthru
          _
        %s156 = sand.u32 %s28, 1
        %s157 = scalar_lea.sflag [#allocation3], %s156
        %s158 = sand.u32 %s28, 1
        %s159 = smul.addr %s158, 2
        %s160 = scalar_lea.vmem [#allocation2], %s159
        %p161 = pneg %p41
        %p162 = pneg %p38
        %p163 = pneg %p62
        %p164 = pneg %p59
        %p165 = pneg %p88
        %p166 = pneg %p85
        %s167 = sand.u32 %s75, 1
        %s168 = scalar_lea.sflag [#allocation4], %s167
        %s169 = sand.u32 %s75, 1
        %s170 = smul.addr %s169, 2
        %s171 = scalar_lea.vmem [#allocation7], %s170
        %v172 = vld [vmem:[%s147] sm:$0x3]
        %v173 = vld [vmem:[#allocation5] sm:$0x3]
        %v174 = vadd.f32 %v172, %v173
        %175 = vst [vmem:[%s171] sm:$0x3] %v174
        %s176 = sand.u32 %s75, 1
        %s177 = scalar_lea.sflag [#allocation4], %s176
        %s178 = sand.u32 %s75, 1
        %s179 = smul.addr %s178, 2
        %s180 = scalar_lea.vmem [#allocation7], %s179
        // Predicated region
        $region37: #{tpu_custom_call.1} parent=27 // pred_check
          %p181 = pneg %p85
        $region38: #{tpu_custom_call.1} parent=27 // pred_check_branch
          %183 = sbr.rel (%p181) target = $region40
        $region39: #{tpu_custom_call.1} parent=27 // pred_region
          %s185 = ssub.s32 32, 32
          %186 = vsyncadd %s177, %s185
          %s187 = smul.addr %s20, 32
          %s188 = scalar_lea.hbm %s2, %s187
          %s190 = sshll.u32 %s180, 4
          %s191 = int_to_ptr.vmem [resolvable:$true] %s190
          %193 = dma.vmem_to_hbm [thread:$0]  %s191, 32, %s188, %s177
        $region40: #{tpu_custom_call.1} parent=27 // pred_fallthru
          _
      $region28: #{tpu_custom_call.1} parent=5 // pred_fallthru
        _
      %p194 = scmp.le.s32.totalorder 2, %s15
      // Predicated region
      $region41: #{tpu_custom_call.1} parent=5 // pred_check
        %p195 = pneg %p194
      $region42: #{tpu_custom_call.1} parent=5 // pred_check_branch
        %197 = sbr.rel (%p195) target = $region44
      $region43: #{tpu_custom_call.1} parent=5 // pred_region
        %s198 = ssub.s32 %s15, 2
        // Predicated region
        $region45: #{tpu_custom_call.1} parent=43 // pred_check
          %p199 = pneg %p91
        $region46: #{tpu_custom_call.1} parent=43 // pred_check_branch
          %201 = sbr.rel (%p199) target = $region48
        $region47: #{tpu_custom_call.1} parent=43 // pred_region
          %s202 = sand.u32 %s76, 1
          %s203 = scalar_lea.sflag [#allocation4], %s202
          %s204 = sand.u32 %s76, 1
          %s205 = smul.addr %s204, 2
          %s206 = scalar_lea.vmem [#allocation7], %s205
          %207 = dma.done %s203, 32
        $region48: #{tpu_custom_call.1} parent=43 // pred_fallthru
          _
      $region44: #{tpu_custom_call.1} parent=5 // pred_fallthru
        _
    $region6: #{tpu_custom_call.1} parent=1 // loop_footer
      %s19 = sadd.s32 1, %s15
    $region7: #{tpu_custom_call.1} parent=1 // loop_footer_branch
      %14 = sbr.rel target = $region3
    $region8: #{tpu_custom_call.1} parent=1 // loop_exit
      _
    %208 = vsyncpa [#allocation3], 1
    %s209 = scalar_lea.sflag [#allocation3], 1
    %210 = vsyncpa %s209, 1
    %211 = vsyncpa [#allocation6], 1
    %212 = vsyncpa [#allocation4], 1
    %s213 = scalar_lea.sflag [#allocation4], 1
    %214 = vsyncpa %s213, 1

</llo_original>
